<compile_context>
chip_gen: v7x
topology: tpu7x:2x2x1
jax: 0.10.0
libtpu: 0.0.40
codegen_flags: <defaults>
</compile_context>

<pallas_src>
import functools

import jax
import jax.numpy as jnp
from jax.experimental import pallas as pl
from jax.experimental.pallas import tpu as pltpu


NEG_SLOPE = 0.01  # PyTorch nn.LeakyReLU default


def _leaky_relu(x):
    return jnp.where(x > 0, x, NEG_SLOPE * x)


def _round_up(x, m):
    return (x + m - 1) // m * m


# -----------------------------------------------------------------------------
# Kernels.  grid = (batch_tiles, L); outputs are the resident accumulators.
# -----------------------------------------------------------------------------
def realnvp_kernel_fused(z_in_ref, mask_ref, w1_ref, b1_ref, w2_ref, b2_ref,
                         w3_ref, b3_ref, z_out_ref, ldj_out_ref, *, resident):
    """Fused scale/train MLP (block-diagonal, used when 2H <= 128)."""
    l = pl.program_id(1)
    wl = l if resident else 0  # resident weights: full (L,...) block, index by layer

    @pl.when(l == 0)
    def _():
        z_out_ref[...] = z_in_ref[...]
        ldj_out_ref[...] = jnp.zeros_like(ldj_out_ref)

    z = z_out_ref[...]                      # (TB, Dp) f32, VMEM-resident across l
    mask = mask_ref[wl]                     # (1, Dp)
    inv_mask = 1.0 - mask
    z_masked = mask * z

    # bf16 operands, f32 MXU accumulation; biases stay f32.
    h = jnp.dot(z_masked.astype(jnp.bfloat16), w1_ref[wl],
                preferred_element_type=jnp.float32) + b1_ref[wl]
    h = _leaky_relu(h)
    h = jnp.dot(h.astype(jnp.bfloat16), w2_ref[wl],
                preferred_element_type=jnp.float32) + b2_ref[wl]
    h = _leaky_relu(h)
    st = jnp.dot(h.astype(jnp.bfloat16), w3_ref[wl],
                 preferred_element_type=jnp.float32) + b3_ref[wl]   # (TB, 2*Dp)

    dp = z.shape[1]
    s = jnp.tanh(st[:, :dp]) * inv_mask
    t = st[:, dp:] * inv_mask

    z_out_ref[...] = inv_mask * (z - t) * jnp.exp(-s) + z_masked
    ldj_out_ref[...] = ldj_out_ref[...] - jnp.sum(s, axis=1, keepdims=True)


def realnvp_kernel_split(z_in_ref, mask_ref, w1_ref, b1_ref,
                         w2s_ref, b2s_ref, w2t_ref, b2t_ref,
                         w3s_ref, b3s_ref, w3t_ref, b3t_ref,
                         z_out_ref, ldj_out_ref, *, resident, hp):
    """Wide-hidden variant (2H > 128): middle/output matmuls split per branch,
    halving the MXU FLOPs / weight bytes of the block-diagonal layout."""
    l = pl.program_id(1)
    wl = l if resident else 0

    @pl.when(l == 0)
    def _():
        z_out_ref[...] = z_in_ref[...]
        ldj_out_ref[...] = jnp.zeros_like(ldj_out_ref)

    z = z_out_ref[...]
    mask = mask_ref[wl]
    inv_mask = 1.0 - mask
    z_masked = mask * z

    h = jnp.dot(z_masked.astype(jnp.bfloat16), w1_ref[wl],
                preferred_element_type=jnp.float32) + b1_ref[wl]    # (TB, 2*Hp)
    h = _leaky_relu(h)
    hs = h[:, :hp].astype(jnp.bfloat16)     # hp is a multiple of 128 -> lane-aligned
    ht = h[:, hp:].astype(jnp.bfloat16)

    hs = _leaky_relu(jnp.dot(hs, w2s_ref[wl],
                             preferred_element_type=jnp.float32) + b2s_ref[wl])
    ht = _leaky_relu(jnp.dot(ht, w2t_ref[wl],
                             preferred_element_type=jnp.float32) + b2t_ref[wl])

    s_raw = jnp.dot(hs.astype(jnp.bfloat16), w3s_ref[wl],
                    preferred_element_type=jnp.float32) + b3s_ref[wl]   # (TB, Dp)
    t_raw = jnp.dot(ht.astype(jnp.bfloat16), w3t_ref[wl],
                    preferred_element_type=jnp.float32) + b3t_ref[wl]   # (TB, Dp)

    s = jnp.tanh(s_raw) * inv_mask
    t = t_raw * inv_mask
    z_out_ref[...] = inv_mask * (z - t) * jnp.exp(-s) + z_masked
    ldj_out_ref[...] = ldj_out_ref[...] - jnp.sum(s, axis=1, keepdims=True)


# -----------------------------------------------------------------------------
# Weight preparation: stack per layer in execution (reversed) order, pad to
# lane-dense shapes, cast matmul weights to bf16 (biases/masks stay f32).
# -----------------------------------------------------------------------------
def _prepare_weights(params, masks, d, d_pad, h):
    n_layers = len(params)
    use_split = 2 * h > 128
    order = list(reversed(range(n_layers)))     # forward() iterates layers in reverse

    # Padded feature columns get mask = 1 -> inv_mask = 0: padded z stays 0 and
    # contributes exactly nothing to s / t / log_det_J.
    mask_p = jnp.ones((n_layers, 1, d_pad), jnp.float32)
    mask_p = mask_p.at[:, 0, :d].set(jnp.stack([masks[i] for i in order]))

    def stack(build):
        return jnp.stack([build(params[i]) for i in order])

    if not use_split:
        hh = max(128, _round_up(2 * h, 128))
        w1 = stack(lambda p: jnp.zeros((d_pad, hh), jnp.float32)
                   .at[:d, :h].set(p["ws1"]).at[:d, h:2 * h].set(p["wt1"]))
        b1 = stack(lambda p: jnp.zeros((1, hh), jnp.float32)
                   .at[:, :h].set(p["bs1"]).at[:, h:2 * h].set(p["bt1"]))
        w2 = stack(lambda p: jnp.zeros((hh, hh), jnp.float32)
                   .at[:h, :h].set(p["ws2"]).at[h:2 * h, h:2 * h].set(p["wt2"]))
        b2 = stack(lambda p: jnp.zeros((1, hh), jnp.float32)
                   .at[:, :h].set(p["bs2"]).at[:, h:2 * h].set(p["bt2"]))
        w3 = stack(lambda p: jnp.zeros((hh, 2 * d_pad), jnp.float32)
                   .at[:h, :d].set(p["ws3"])
                   .at[h:2 * h, d_pad:d_pad + d].set(p["wt3"]))
        b3 = stack(lambda p: jnp.zeros((1, 2 * d_pad), jnp.float32)
                   .at[:, :d].set(p["bs3"]).at[:, d_pad:d_pad + d].set(p["bt3"]))
        weights = [w1.astype(jnp.bfloat16), b1,
                   w2.astype(jnp.bfloat16), b2,
                   w3.astype(jnp.bfloat16), b3]
        return mask_p, weights, dict(use_split=False, hh=hh)

    hp = _round_up(h, 128)
    w1 = stack(lambda p: jnp.zeros((d_pad, 2 * hp), jnp.float32)
               .at[:d, :h].set(p["ws1"]).at[:d, hp:hp + h].set(p["wt1"]))
    b1 = stack(lambda p: jnp.zeros((1, 2 * hp), jnp.float32)
               .at[:, :h].set(p["bs1"]).at[:, hp:hp + h].set(p["bt1"]))

    def pad_w2(w):
        return jnp.zeros((hp, hp), jnp.float32).at[:h, :h].set(w)

    def pad_w3(w):
        return jnp.zeros((hp, d_pad), jnp.float32).at[:h, :d].set(w)

    def pad_b(b, width):
        return jnp.zeros((1, width), jnp.float32).at[:, :b.shape[1]].set(b)

    w2s = stack(lambda p: pad_w2(p["ws2"]))
    b2s = stack(lambda p: pad_b(p["bs2"], hp))
    w2t = stack(lambda p: pad_w2(p["wt2"]))
    b2t = stack(lambda p: pad_b(p["bt2"], hp))
    w3s = stack(lambda p: pad_w3(p["ws3"]))
    b3s = stack(lambda p: pad_b(p["bs3"], d_pad))
    w3t = stack(lambda p: pad_w3(p["wt3"]))
    b3t = stack(lambda p: pad_b(p["bt3"], d_pad))
    weights = [w1.astype(jnp.bfloat16), b1,
               w2s.astype(jnp.bfloat16), b2s, w2t.astype(jnp.bfloat16), b2t,
               w3s.astype(jnp.bfloat16), b3s, w3t.astype(jnp.bfloat16), b3t]
    return mask_p, weights, dict(use_split=True, hp=hp)


def _choose_batch_tiling(batch, max_tile=256):
    b_pad = _round_up(batch, 8)
    tile = min(max_tile, b_pad)
    if batch >= 16:
        # Keep >= 2 batch tiles so the "parallel" axis can shard across the two
        # v7x TensorCores (harmless on single-TC v5e/v6e).
        tile = min(tile, max(8, (b_pad // 2) // 8 * 8))
    b_pad = _round_up(b_pad, tile)
    return tile, b_pad


def _param_spec(shape, resident):
    ndim = len(shape)
    if resident:
        zeros = (0,) * ndim
        return pl.BlockSpec(tuple(shape), lambda b, l, _z=zeros: _z)
    tail = (0,) * (ndim - 1)
    return pl.BlockSpec((1,) + tuple(shape[1:]), lambda b, l, _t=tail: (l,) + _t)


# -----------------------------------------------------------------------------
# Wrapper: one pallas_call for the whole flow.
# -----------------------------------------------------------------------------
def realnvp_forward(x, masks, params):
    """RealNvp_net.forward: x (B, C, H, W) -> (z (B, D), log_det_J (B,))."""
    batch = x.shape[0]
    z0 = x.reshape(batch, -1).astype(jnp.float32)
    d = z0.shape[1]
    n_layers = len(params)
    assert masks.shape[0] == n_layers and masks.shape[1] == d
    h = params[0]["ws1"].shape[1]

    d_pad = _round_up(d, 128)
    tile_b, b_pad = _choose_batch_tiling(batch)
    nb = b_pad // tile_b

    z_in = jnp.zeros((b_pad, d_pad), jnp.float32).at[:batch, :d].set(z0)

    mask_p, weights, meta = _prepare_weights(params, masks, d, d_pad, h)
    operands = [mask_p] + weights

    # Keep the full stacked (L, ...) parameter set VMEM-resident when it comfortably
    # fits (x2 for Pallas' default double-buffering); otherwise stream per layer.
    weight_bytes = sum(int(a.size) * a.dtype.itemsize for a in operands)
    resident = weight_bytes <= 12 * 1024 * 1024

    if meta["use_split"]:
        kernel = functools.partial(realnvp_kernel_split, resident=resident,
                                   hp=meta["hp"])
        hidden_width = 2 * meta["hp"]
        layer_flops = 2 * (d_pad * 2 * meta["hp"] + 2 * meta["hp"] * meta["hp"]
                           + 2 * meta["hp"] * d_pad)
    else:
        kernel = functools.partial(realnvp_kernel_fused, resident=resident)
        hidden_width = meta["hh"]
        layer_flops = 2 * (d_pad * meta["hh"] + meta["hh"] * meta["hh"]
                           + meta["hh"] * 2 * d_pad)

    in_specs = [pl.BlockSpec((tile_b, d_pad), lambda b, l: (b, 0))]
    in_specs += [_param_spec(a.shape, resident) for a in operands]
    out_specs = (
        pl.BlockSpec((tile_b, d_pad), lambda b, l: (b, 0)),   # z: resident across l
        pl.BlockSpec((tile_b, 1), lambda b, l: (b, 0)),       # log_det_J
    )

    # Explicit scoped-VMEM budget (>= 32 MiB so v5e/v6e defaults don't bind,
    # <= 56 MiB to respect v7x's 64 MiB physical ceiling with headroom).
    per_step_w_vmem = 2 * (weight_bytes if resident else weight_bytes // n_layers)
    io_vmem = 2 * (2 * tile_b * d_pad * 4) + 2 * tile_b * 4
    act_vmem = tile_b * (2 * hidden_width + 6 * d_pad) * 4
    vmem_limit = int(min(56 * 2**20,
                         max(32 * 2**20, 2 * (per_step_w_vmem + io_vmem + act_vmem))))

    flops = b_pad * n_layers * layer_flops
    transcendentals = b_pad * n_layers * 2 * d_pad          # tanh + exp per element
    bytes_accessed = 4 * (2 * b_pad * d_pad + b_pad) + \
        (weight_bytes if resident else nb * weight_bytes)

    z_out, ldj = pl.pallas_call(
        kernel,
        out_shape=(
            jax.ShapeDtypeStruct((b_pad, d_pad), jnp.float32),
            jax.ShapeDtypeStruct((b_pad, 1), jnp.float32),
        ),
        grid_spec=pltpu.PrefetchScalarGridSpec(
            num_scalar_prefetch=0,
            grid=(nb, n_layers),
            in_specs=in_specs,
            out_specs=out_specs,
        ),
        compiler_params=pltpu.CompilerParams(
            dimension_semantics=("parallel", "arbitrary"),
            vmem_limit_bytes=vmem_limit,
        ),
        cost_estimate=pl.CostEstimate(
            flops=flops,
            transcendentals=transcendentals,
            bytes_accessed=bytes_accessed,
        ),
    )(z_in, *operands)

    return z_out[:batch, :d], ldj[:batch, 0]


# -----------------------------------------------------------------------------
# Module setup helpers (masks / synthetic params) and pure-JAX reference.
# -----------------------------------------------------------------------------
def make_masks(couple_layers, input_size):
    assert couple_layers % 2 == 0, "RealNvp_net requires an even couple_layers"
    d = input_size * input_size
    mask1 = (jnp.arange(d) % 2).astype(jnp.float32)
    mask2 = 1.0 - mask1
    rows = []
    for _ in range(couple_layers // 2):
        rows.append(mask1)
        rows.append(mask2)
    return jnp.stack(rows, axis=0)              # (L, D)


def init_params(key, couple_layers, d, h):
    """Deterministic synthetic weights. Linear stored as (in, out): x @ W + b."""
    params = []
    for _ in range(couple_layers):
        layer = {}
        for prefix, dims in (
            ("ws1", (d, h)), ("ws2", (h, h)), ("ws3", (h, d)),
            ("wt1", (d, h)), ("wt2", (h, h)), ("wt3", (h, d)),
        ):
            key, kw, kb = jax.random.split(key, 3)
            layer[prefix] = 0.05 * jax.random.normal(kw, dims, jnp.float32)
            layer["b" + prefix[1:]] = 0.05 * jax.random.normal(
                kb, (1, dims[1]), jnp.float32)
        params.append(layer)
    return params


def realnvp_forward_ref(x, masks, params, matmul_dtype=jnp.float32):
    """Pure-JAX reference mirroring RealNvp_net.forward (optionally with the same
    bf16 matmul-operand rounding as the kernel, f32 accumulation)."""
    batch = x.shape[0]
    z = x.reshape(batch, -1).astype(jnp.float32)
    log_det_j = jnp.zeros((batch,), jnp.float32)

    def mm(a, w):
        return jnp.dot(a.astype(matmul_dtype), w.astype(matmul_dtype),
                       preferred_element_type=jnp.float32)

    for i in reversed(range(masks.shape[0])):
        m = masks[i][None, :]
        inv_m = 1.0 - m
        z_ = m * z
        p = params[i]

        def mlp(zz, w1, b1, w2, b2, w3, b3):
            hh = _leaky_relu(mm(zz, w1) + b1)
            hh = _leaky_relu(mm(hh, w2) + b2)
            return mm(hh, w3) + b3

        s = jnp.tanh(mlp(z_, p["ws1"], p["bs1"], p["ws2"], p["bs2"],
                         p["ws3"], p["bs3"])) * inv_m
        t = mlp(z_, p["wt1"], p["bt1"], p["wt2"], p["bt2"],
                p["wt3"], p["bt3"]) * inv_m
        z = inv_m * (z - t) * jnp.exp(-s) + z_
        log_det_j = log_det_j - s.sum(axis=1)
    return z, log_det_j


def _run_case(name, key, batch, input_size, couple_layers, hidden):
    d = input_size * input_size
    kx, kp = jax.random.split(key)
    x = jax.random.normal(kx, (batch, 1, input_size, input_size), jnp.float32)
    masks = make_masks(couple_layers, input_size)
    params = init_params(kp, couple_layers, d, hidden)

    z, ldj = realnvp_forward(x, masks, params)
    z = jax.block_until_ready(z)
    ldj = jax.block_until_ready(ldj)
    assert z.shape == (batch, d) and ldj.shape == (batch,), name

    # Tight check vs a reference using the same bf16 operand rounding.
    z_bf, ldj_bf = realnvp_forward_ref(x, masks, params, jnp.bfloat16)
    assert jnp.allclose(z, z_bf, atol=3e-3, rtol=3e-3), f"{name}: z vs bf16 ref"
    assert jnp.allclose(ldj, ldj_bf, atol=3e-3, rtol=3e-3), f"{name}: ldj vs bf16 ref"

    # Loose check vs the exact f32 reference (bf16 operands, f32 accumulation).
    z32, ldj32 = realnvp_forward_ref(x, masks, params, jnp.float32)
    assert jnp.allclose(z, z32, atol=1e-1, rtol=1e-1), f"{name}: z vs f32 ref"
    assert jnp.allclose(ldj, ldj32, atol=1e-1, rtol=1e-1), f"{name}: ldj vs f32 ref"


if __name__ == "__main__":
    key = jax.random.PRNGKey(0)
    k1, k2, k3 = jax.random.split(key, 3)
    # 2H <= 128 -> fused block-diagonal MLP (HH=128), aligned D=256.
    _run_case("fused", k1, batch=8, input_size=16, couple_layers=4, hidden=32)
    # 2H > 128 -> split per-branch matmuls (no block-diagonal zero FLOPs).
    _run_case("split", k2, batch=8, input_size=16, couple_layers=4, hidden=96)
    # Non-aligned D (100 -> 128) and non-multiple-of-8 batch (6 -> 8): pad & slice.
    _run_case("padded", k3, batch=6, input_size=10, couple_layers=2, hidden=32)
    print("KERNEL_OK")
</pallas_src>

<mosaic_0001>
module attributes {stable_mosaic.version = 11 : i64} {
  func.func @realnvp_kernel_fused(%arg0: i32, %arg1: i32, %arg2: memref<8x256xf32, #tpu.memory_space<vmem>>, %arg3: memref<4x1x256xf32, #tpu.memory_space<vmem>>, %arg4: memref<4x256x128xbf16, #tpu.memory_space<vmem>>, %arg5: memref<4x1x128xf32, #tpu.memory_space<vmem>>, %arg6: memref<4x128x128xbf16, #tpu.memory_space<vmem>>, %arg7: memref<4x1x128xf32, #tpu.memory_space<vmem>>, %arg8: memref<4x128x512xbf16, #tpu.memory_space<vmem>>, %arg9: memref<4x1x512xf32, #tpu.memory_space<vmem>>, %arg10: memref<8x256xf32, #tpu.memory_space<vmem>>, %arg11: memref<8x1xf32, #tpu.memory_space<vmem>>) attributes {dimension_semantics = [#tpu.dimension_semantics<parallel>, #tpu.dimension_semantics<arbitrary>], iteration_bounds = array<i64: 1, 4>, scalar_prefetch = 0 : i64, scratch_operands = 0 : i64, tpu.core_type = #tpu.core_type<tc>, window_params = [{transform_indices = @transform_0, window_bounds = array<i64: 8, 256>}, {pipeline_mode = #tpu.pipeline_mode<synchronous>, transform_indices = @transform_1, window_bounds = array<i64: 4, 1, 256>}, {pipeline_mode = #tpu.pipeline_mode<synchronous>, transform_indices = @transform_2, window_bounds = array<i64: 4, 256, 128>}, {pipeline_mode = #tpu.pipeline_mode<synchronous>, transform_indices = @transform_3, window_bounds = array<i64: 4, 1, 128>}, {pipeline_mode = #tpu.pipeline_mode<synchronous>, transform_indices = @transform_4, window_bounds = array<i64: 4, 128, 128>}, {pipeline_mode = #tpu.pipeline_mode<synchronous>, transform_indices = @transform_5, window_bounds = array<i64: 4, 1, 128>}, {pipeline_mode = #tpu.pipeline_mode<synchronous>, transform_indices = @transform_6, window_bounds = array<i64: 4, 128, 512>}, {pipeline_mode = #tpu.pipeline_mode<synchronous>, transform_indices = @transform_7, window_bounds = array<i64: 4, 1, 512>}, {transform_indices = @transform_8, window_bounds = array<i64: 8, 256>}, {transform_indices = @transform_9, window_bounds = array<i64: 8, 1>}]} {
    %c0_i32 = arith.constant 0 : i32
    %0 = arith.cmpi eq, %arg1, %c0_i32 : i32
    %1 = arith.extui %0 : i1 to i32
    %c0_i32_0 = arith.constant 0 : i32
    %2 = arith.cmpi ne, %1, %c0_i32_0 : i32
    scf.if %2 {
      %c0_31 = arith.constant 0 : index
      %c0_32 = arith.constant 0 : index
      %72 = vector.load %arg2[%c0_31, %c0_32] : memref<8x256xf32, #tpu.memory_space<vmem>>, vector<8x256xf32>
      %c0_33 = arith.constant 0 : index
      %c0_34 = arith.constant 0 : index
      %73 = vector.load %arg10[%c0_33, %c0_34] : memref<8x256xf32, #tpu.memory_space<vmem>>, vector<8x256xf32>
      tpu.vector_store %arg10[%c0_33, %c0_34], %72 {strides = array<i32>} : memref<8x256xf32, #tpu.memory_space<vmem>>, vector<8x256xf32>,
      %cst_35 = arith.constant 0.000000e+00 : f32
      %74 = vector.broadcast %cst_35 : f32 to vector<8x1xf32>
      %c0_36 = arith.constant 0 : index
      %c0_37 = arith.constant 0 : index
      %75 = vector.load %arg11[%c0_36, %c0_37] : memref<8x1xf32, #tpu.memory_space<vmem>>, vector<8x1xf32>
      tpu.vector_store %arg11[%c0_36, %c0_37], %74 {strides = array<i32>} : memref<8x1xf32, #tpu.memory_space<vmem>>, vector<8x1xf32>,
    } else {
    }
    %c0 = arith.constant 0 : index
    %c0_1 = arith.constant 0 : index
    %3 = vector.load %arg10[%c0, %c0_1] : memref<8x256xf32, #tpu.memory_space<vmem>>, vector<8x256xf32>
    %4 = arith.index_cast %arg1 : i32 to index
    %c0_2 = arith.constant 0 : index
    %c0_3 = arith.constant 0 : index
    %5 = vector.load %arg3[%4, %c0_2, %c0_3] : memref<4x1x256xf32, #tpu.memory_space<vmem>>, vector<1x1x256xf32>
    %6 = vector.shape_cast %5 : vector<1x1x256xf32> to vector<1x256xf32>
    %cst = arith.constant 1.000000e+00 : f32
    %7 = vector.broadcast %cst : f32 to vector<1x256xf32>
    %8 = arith.subf %7, %6 : vector<1x256xf32>
    %9 = vector.broadcast %6 : vector<1x256xf32> to vector<8x256xf32>
    %10 = arith.mulf %9, %3 : vector<8x256xf32>
    %11 = arith.truncf %10 : vector<8x256xf32> to vector<8x256xbf16>
    %12 = arith.index_cast %arg1 : i32 to index
    %c0_4 = arith.constant 0 : index
    %c0_5 = arith.constant 0 : index
    %13 = vector.load %arg4[%12, %c0_4, %c0_5] : memref<4x256x128xbf16, #tpu.memory_space<vmem>>, vector<1x256x128xbf16>
    %14 = vector.shape_cast %13 : vector<1x256x128xbf16> to vector<256x128xbf16>
    %cst_6 = arith.constant dense<0.000000e+00> : vector<8x128xf32>
    %15 = tpu.matmul %11, %14, %cst_6 {dimension_numbers = #tpu.dot_dimension_numbers<[1], [0], [0], [1], [0, 0, 1, 1], [], []>} : vector<8x256xbf16>, vector<256x128xbf16>, vector<8x128xf32> -> vector<8x128xf32>
    %16 = arith.index_cast %arg1 : i32 to index
    %c0_7 = arith.constant 0 : index
    %c0_8 = arith.constant 0 : index
    %17 = vector.load %arg5[%16, %c0_7, %c0_8] : memref<4x1x128xf32, #tpu.memory_space<vmem>>, vector<1x1x128xf32>
    %18 = vector.shape_cast %17 : vector<1x1x128xf32> to vector<1x128xf32>
    %19 = vector.broadcast %18 : vector<1x128xf32> to vector<8x128xf32>
    %20 = arith.addf %15, %19 : vector<8x128xf32>
    %cst_9 = arith.constant 0.000000e+00 : f32
    %21 = vector.broadcast %cst_9 : f32 to vector<8x128xf32>
    %22 = arith.cmpf ogt, %20, %21 : vector<8x128xf32>
    %cst_10 = arith.constant 0.00999999977 : f32
    %23 = vector.broadcast %cst_10 : f32 to vector<8x128xf32>
    %24 = arith.mulf %23, %20 : vector<8x128xf32>
    %25 = arith.select %22, %20, %24 : vector<8x128xi1>, vector<8x128xf32>
    %26 = arith.truncf %25 : vector<8x128xf32> to vector<8x128xbf16>
    %27 = arith.index_cast %arg1 : i32 to index
    %c0_11 = arith.constant 0 : index
    %c0_12 = arith.constant 0 : index
    %28 = vector.load %arg6[%27, %c0_11, %c0_12] : memref<4x128x128xbf16, #tpu.memory_space<vmem>>, vector<1x128x128xbf16>
    %29 = vector.shape_cast %28 : vector<1x128x128xbf16> to vector<128x128xbf16>
    %cst_13 = arith.constant dense<0.000000e+00> : vector<8x128xf32>
    %30 = tpu.matmul %26, %29, %cst_13 {dimension_numbers = #tpu.dot_dimension_numbers<[1], [0], [0], [1], [0, 0, 1, 1], [], []>} : vector<8x128xbf16>, vector<128x128xbf16>, vector<8x128xf32> -> vector<8x128xf32>
    %31 = arith.index_cast %arg1 : i32 to index
    %c0_14 = arith.constant 0 : index
    %c0_15 = arith.constant 0 : index
    %32 = vector.load %arg7[%31, %c0_14, %c0_15] : memref<4x1x128xf32, #tpu.memory_space<vmem>>, vector<1x1x128xf32>
    %33 = vector.shape_cast %32 : vector<1x1x128xf32> to vector<1x128xf32>
    %34 = vector.broadcast %33 : vector<1x128xf32> to vector<8x128xf32>
    %35 = arith.addf %30, %34 : vector<8x128xf32>
    %cst_16 = arith.constant 0.000000e+00 : f32
    %36 = vector.broadcast %cst_16 : f32 to vector<8x128xf32>
    %37 = arith.cmpf ogt, %35, %36 : vector<8x128xf32>
    %cst_17 = arith.constant 0.00999999977 : f32
    %38 = vector.broadcast %cst_17 : f32 to vector<8x128xf32>
    %39 = arith.mulf %38, %35 : vector<8x128xf32>
    %40 = arith.select %37, %35, %39 : vector<8x128xi1>, vector<8x128xf32>
    %41 = arith.truncf %40 : vector<8x128xf32> to vector<8x128xbf16>
    %42 = arith.index_cast %arg1 : i32 to index
    %c0_18 = arith.constant 0 : index
    %c0_19 = arith.constant 0 : index
    %43 = vector.load %arg8[%42, %c0_18, %c0_19] : memref<4x128x512xbf16, #tpu.memory_space<vmem>>, vector<1x128x512xbf16>
    %44 = vector.shape_cast %43 : vector<1x128x512xbf16> to vector<128x512xbf16>
    %cst_20 = arith.constant dense<0.000000e+00> : vector<8x512xf32>
    %45 = tpu.matmul %41, %44, %cst_20 {dimension_numbers = #tpu.dot_dimension_numbers<[1], [0], [0], [1], [0, 0, 1, 1], [], []>} : vector<8x128xbf16>, vector<128x512xbf16>, vector<8x512xf32> -> vector<8x512xf32>
    %46 = arith.index_cast %arg1 : i32 to index
    %c0_21 = arith.constant 0 : index
    %c0_22 = arith.constant 0 : index
    %47 = vector.load %arg9[%46, %c0_21, %c0_22] : memref<4x1x512xf32, #tpu.memory_space<vmem>>, vector<1x1x512xf32>
    %48 = vector.shape_cast %47 : vector<1x1x512xf32> to vector<1x512xf32>
    %49 = vector.broadcast %48 : vector<1x512xf32> to vector<8x512xf32>
    %50 = arith.addf %45, %49 : vector<8x512xf32>
    %51 = vector.extract_strided_slice %50 {offsets = [0, 0], sizes = [8, 256], strides = [1, 1]} : vector<8x512xf32> to vector<8x256xf32>
    %52 = math.tanh %51 : vector<8x256xf32>
    %53 = vector.broadcast %8 : vector<1x256xf32> to vector<8x256xf32>
    %54 = arith.mulf %52, %53 : vector<8x256xf32>
    %55 = vector.extract_strided_slice %50 {offsets = [0, 256], sizes = [8, 256], strides = [1, 1]} : vector<8x512xf32> to vector<8x256xf32>
    %56 = vector.broadcast %8 : vector<1x256xf32> to vector<8x256xf32>
    %57 = arith.mulf %55, %56 : vector<8x256xf32>
    %58 = arith.subf %3, %57 : vector<8x256xf32>
    %59 = vector.broadcast %8 : vector<1x256xf32> to vector<8x256xf32>
    %60 = arith.mulf %59, %58 : vector<8x256xf32>
    %cst_23 = arith.constant 0.000000e+00 : f32
    %61 = vector.broadcast %cst_23 : f32 to vector<8x256xf32>
    %62 = arith.subf %61, %54 : vector<8x256xf32>
    %63 = math.exp %62 : vector<8x256xf32>
    %64 = arith.mulf %60, %63 : vector<8x256xf32>
    %65 = arith.addf %64, %10 : vector<8x256xf32>
    %c0_24 = arith.constant 0 : index
    %c0_25 = arith.constant 0 : index
    %66 = vector.load %arg10[%c0_24, %c0_25] : memref<8x256xf32, #tpu.memory_space<vmem>>, vector<8x256xf32>
    tpu.vector_store %arg10[%c0_24, %c0_25], %65 {strides = array<i32>} : memref<8x256xf32, #tpu.memory_space<vmem>>, vector<8x256xf32>,
    %c0_26 = arith.constant 0 : index
    %c0_27 = arith.constant 0 : index
    %67 = vector.load %arg11[%c0_26, %c0_27] : memref<8x1xf32, #tpu.memory_space<vmem>>, vector<8x1xf32>
    %cst_28 = arith.constant dense<0.000000e+00> : vector<8xf32>
    %68 = vector.multi_reduction <add>, %54, %cst_28 [1] : vector<8x256xf32> to vector<8xf32>
    %69 = vector.shape_cast %68 : vector<8xf32> to vector<8x1xf32>
    %70 = arith.subf %67, %69 : vector<8x1xf32>
    %c0_29 = arith.constant 0 : index
    %c0_30 = arith.constant 0 : index
    %71 = vector.load %arg11[%c0_29, %c0_30] : memref<8x1xf32, #tpu.memory_space<vmem>>, vector<8x1xf32>
    tpu.vector_store %arg11[%c0_29, %c0_30], %70 {strides = array<i32>} : memref<8x1xf32, #tpu.memory_space<vmem>>, vector<8x1xf32>,
    return
  }
  func.func @transform_0(%arg0: i32, %arg1: i32) -> (i32, i32) {
    %c0_i32 = arith.constant 0 : i32
    %c0_i32_0 = arith.constant 0 : i32
    return %arg0, %c0_i32 : i32, i32
  }
  func.func @transform_1(%arg0: i32, %arg1: i32) -> (i32, i32, i32) {
    %c0_i32 = arith.constant 0 : i32
    %c0_i32_0 = arith.constant 0 : i32
    %c0_i32_1 = arith.constant 0 : i32
    %c0_i32_2 = arith.constant 0 : i32
    return %c0_i32, %c0_i32_0, %c0_i32_1 : i32, i32, i32
  }
  func.func @transform_2(%arg0: i32, %arg1: i32) -> (i32, i32, i32) {
    %c0_i32 = arith.constant 0 : i32
    %c0_i32_0 = arith.constant 0 : i32
    %c0_i32_1 = arith.constant 0 : i32
    %c0_i32_2 = arith.constant 0 : i32
    return %c0_i32, %c0_i32_0, %c0_i32_1 : i32, i32, i32
  }
  func.func @transform_3(%arg0: i32, %arg1: i32) -> (i32, i32, i32) {
    %c0_i32 = arith.constant 0 : i32
    %c0_i32_0 = arith.constant 0 : i32
    %c0_i32_1 = arith.constant 0 : i32
    %c0_i32_2 = arith.constant 0 : i32
    return %c0_i32, %c0_i32_0, %c0_i32_1 : i32, i32, i32
  }
  func.func @transform_4(%arg0: i32, %arg1: i32) -> (i32, i32, i32) {
    %c0_i32 = arith.constant 0 : i32
    %c0_i32_0 = arith.constant 0 : i32
    %c0_i32_1 = arith.constant 0 : i32
    %c0_i32_2 = arith.constant 0 : i32
    return %c0_i32, %c0_i32_0, %c0_i32_1 : i32, i32, i32
  }
  func.func @transform_5(%arg0: i32, %arg1: i32) -> (i32, i32, i32) {
    %c0_i32 = arith.constant 0 : i32
    %c0_i32_0 = arith.constant 0 : i32
    %c0_i32_1 = arith.constant 0 : i32
    %c0_i32_2 = arith.constant 0 : i32
    return %c0_i32, %c0_i32_0, %c0_i32_1 : i32, i32, i32
  }
  func.func @transform_6(%arg0: i32, %arg1: i32) -> (i32, i32, i32) {
    %c0_i32 = arith.constant 0 : i32
    %c0_i32_0 = arith.constant 0 : i32
    %c0_i32_1 = arith.constant 0 : i32
    %c0_i32_2 = arith.constant 0 : i32
    return %c0_i32, %c0_i32_0, %c0_i32_1 : i32, i32, i32
  }
  func.func @transform_7(%arg0: i32, %arg1: i32) -> (i32, i32, i32) {
    %c0_i32 = arith.constant 0 : i32
    %c0_i32_0 = arith.constant 0 : i32
    %c0_i32_1 = arith.constant 0 : i32
    %c0_i32_2 = arith.constant 0 : i32
    return %c0_i32, %c0_i32_0, %c0_i32_1 : i32, i32, i32
  }
  func.func @transform_8(%arg0: i32, %arg1: i32) -> (i32, i32) {
    %c0_i32 = arith.constant 0 : i32
    %c0_i32_0 = arith.constant 0 : i32
    return %arg0, %c0_i32 : i32, i32
  }
  func.func @transform_9(%arg0: i32, %arg1: i32) -> (i32, i32) {
    %c0_i32 = arith.constant 0 : i32
    %c0_i32_0 = arith.constant 0 : i32
    return %arg0, %c0_i32 : i32, i32
  }
}

</mosaic_0001>

<llo_original>
// kernel: tpu_custom_call.1
$region0: #{tpu_custom_call.1}
  #allocation0 [shape = 'u32[]', space=smem, size = 0x4, offset = 0x4, fixed_abs, tag = 'smem constant byte address 0x4 - core index']
  #allocation1 [shape = 'u32[144,128]{1,0:T(1,128)}', space=vmem, size = 0x12000, scoped, tag = 'internal scratch']
  %s0 = inlined_call_operand.hbm [shape: f32[8,256], index: 0, kind: input, shape index: {}]
  %s1 = inlined_call_operand.hbm [shape: f32[4,1,256], index: 1, kind: input, shape index: {}]
  %s2 = inlined_call_operand.hbm [shape: bf16[4,256,128], index: 2, kind: input, shape index: {}]
  %s3 = inlined_call_operand.vmem [shape: f32[4,1,128], index: 3, kind: input, shape index: {}]
  %s4 = inlined_call_operand.hbm [shape: bf16[4,128,128], index: 4, kind: input, shape index: {}]
  %s5 = inlined_call_operand.vmem [shape: f32[4,1,128], index: 5, kind: input, shape index: {}]
  %s6 = inlined_call_operand.hbm [shape: bf16[4,128,512], index: 6, kind: input, shape index: {}]
  %s7 = inlined_call_operand.vmem [shape: f32[4,1,512], index: 7, kind: input, shape index: {}]
  %s8 = inlined_call_operand.hbm [shape: f32[8,256], index: 8, kind: output, shape index: {0}]
  %s9 = inlined_call_operand.vmem [shape: f32[8,1], index: 9, kind: output, shape index: {1}]
  %10 = xla_tuple %s8, %s9
  %s11 = sld [smem:[#allocation0]]
  $region97: #{tpu_custom_call.1} parent=0
    _
  %s13 = ssub.s32 1, %s11
  %s14 = scalar_select 0, %s13, %s11
  $region1: #{tpu_custom_call.1} parent=0
    #allocation2 [shape = 'u8[8192]{0}', space=vmem, size = 0x2000, scoped, tag = 'input window, operand 0, single buffered']
    #allocation3 [shape = 's32[2]{0}', space=sflag, size = 0x8, scoped, tag = 'scoped memory for tpu_custom_call.1']
    #allocation4 [shape = 's32[2]{0}', space=sflag, size = 0x8, scoped, tag = 'scoped memory for tpu_custom_call.1']
    #allocation5 [shape = 'u8[4096]{0}', space=vmem, size = 0x1000, scoped, tag = 'input window, operand 1, single buffered']
    #allocation6 [shape = 's32[1]{0}', space=sflag, size = 0x4, scoped, tag = 'scoped memory for tpu_custom_call.1']
    #allocation7 [shape = 'u8[262144]{0}', space=vmem, size = 0x40000, scoped, tag = 'input window, operand 2, single buffered']
    #allocation8 [shape = 'u8[131072]{0}', space=vmem, size = 0x20000, scoped, tag = 'input window, operand 4, single buffered']
    #allocation9 [shape = 's32[1]{0}', space=sflag, size = 0x4, scoped, tag = 'scoped memory for tpu_custom_call.1']
    #allocation10 [shape = 'u8[524288]{0}', space=vmem, size = 0x80000, scoped, tag = 'input window, operand 6, single buffered']
    #allocation11 [shape = 'u8[8192]{0}', space=vmem, size = 0x2000, scoped, tag = 'output window, operand 0, single buffered']
    %15 = vsyncpa [#allocation3], 0
    %16 = vsyncpa [#allocation6], 0
    %17 = vsyncpa [#allocation9], 0
    %18 = vsyncpa [#allocation4], 0
    loop: start=0, step=1, limit=6
    $region2: #{tpu_custom_call.1} parent=1 // loop_pre_header
      _
    $region3: #{tpu_custom_call.1} parent=1 // loop_header
      %s20 = sphi 0, %s24
      %p21 = scmp.ge.s32.totalorder %s20, 6
      %s27 = sphi 0, %s39
      %s28 = sphi 0, %s35
      %s29 = sphi 0, %s27
      %s30 = sphi 0, %s28
      %s31 = sphi 0, %s29
      %s32 = sphi 0, %s30
      %s42 = sphi 0, %s44
      %s45 = sphi 0, %s42
      %s46 = sphi 0, %s45
      %s62 = sphi 0, %s46
      %s66 = sphi 0, %s66
      %s68 = sphi 0, %s66
      %s69 = sphi 0, %s68
      %s83 = sphi 0, %s69
      %s87 = sphi 0, %s87
      %s89 = sphi 0, %s87
      %s90 = sphi 0, %s89
      %s104 = sphi 0, %s90
      %s108 = sphi 0, %s108
      %s110 = sphi 0, %s108
      %s111 = sphi 0, %s110
      %s125 = sphi 0, %s111
      %s129 = sphi 0, %s129
      %s131 = sphi 0, %s129
      %s132 = sphi 0, %s131
      %s146 = sphi 0, %s132
      %s150 = sphi 0, %s150
      %s152 = sphi 0, %s150
      %s153 = sphi 0, %s152
      %s167 = sphi 0, %s153
      %s171 = sphi 0, %s171
      %s173 = sphi 0, %s171
      %s174 = sphi 0, %s173
      %s188 = sphi 0, %s174
      %s192 = sphi 0, %s192
      %s194 = sphi 0, %s192
      %s195 = sphi 0, %s194
      %s209 = sphi 0, %s195
      %s215 = sphi 0, %s217
      %s218 = sphi 0, %s215
      %s219 = sphi 0, %s218
      %s235 = sphi 0, %s219
      %s241 = sphi 0, %s243
      %s244 = sphi 0, %s241
      %s245 = sphi 0, %s244
      %s261 = sphi 0, %s245
    $region4: #{tpu_custom_call.1} parent=1 // loop_header_branch
      %23 = sbr.rel (%p21) target = $region8
    $region5: #{tpu_custom_call.1} parent=1 // loop_body
      %s25 = ssub.s32 %s20, 1
      %s26 = ssub.s32 %s20, 2
      %s33 = sadd.s32 1, %s28
      %p34 = scmp.ge.s32.totalorder %s33, 4
      %s35 = scalar_select %p34, 0, %s33
      %s36 = sadd.s32 1, %s27
      %s37 = scalar_select %p34, %s36, %s27
      %p38 = scmp.ge.s32.totalorder %s37, 1
      %s39 = scalar_select %p38, 0, %s37
      %s40 = ssub.s32 %s27, %s39
      %p41 = scmp.eq.s32.totalorder %s40, 0
      %s43 = sadd.s32 %s42, 1
      %s44 = scalar_select %p41, %s42, %s43
      %p47 = pneg %p41
      %p48 = scmp.eq.s32.totalorder %s20, 3
      %p49 = por %p47, %p48
      %p50 = scmp.ne.s32.totalorder %s42, %s45
      %p51 = scmp.eq.s32.totalorder %s20, 0
      %p52 = por %p50, %p51
      %p53 = scmp.ne.s32.totalorder %s42, %s45
      %p54 = scmp.eq.s32.totalorder %s25, 3
      %p55 = por %p53, %p54
      %p56 = scmp.ne.s32.totalorder %s45, %s46
      %p57 = scmp.eq.s32.totalorder %s25, 0
      %p58 = por %p56, %p57
      %p59 = scmp.ne.s32.totalorder %s45, %s46
      %p60 = scmp.eq.s32.totalorder %s26, 3
      %p61 = por %p59, %p60
      %p63 = scmp.ne.s32.totalorder %s46, %s62
      %p64 = scmp.eq.s32.totalorder %s26, 0
      %p65 = por %p63, %p64
      %s67 = sadd.s32 %s66, 1
      %p70 = scmp.eq.s32.totalorder %s20, 3
      %p71 = scmp.ne.s32.totalorder %s66, %s68
      %p72 = scmp.eq.s32.totalorder %s20, 0
      %p73 = por %p71, %p72
      %p74 = scmp.ne.s32.totalorder %s66, %s68
      %p75 = scmp.eq.s32.totalorder %s25, 3
      %p76 = por %p74, %p75
      %p77 = scmp.ne.s32.totalorder %s68, %s69
      %p78 = scmp.eq.s32.totalorder %s25, 0
      %p79 = por %p77, %p78
      %p80 = scmp.ne.s32.totalorder %s68, %s69
      %p81 = scmp.eq.s32.totalorder %s26, 3
      %p82 = por %p80, %p81
      %p84 = scmp.ne.s32.totalorder %s69, %s83
      %p85 = scmp.eq.s32.totalorder %s26, 0
      %p86 = por %p84, %p85
      %s88 = sadd.s32 %s87, 1
      %p91 = scmp.eq.s32.totalorder %s20, 3
      %p92 = scmp.ne.s32.totalorder %s87, %s89
      %p93 = scmp.eq.s32.totalorder %s20, 0
      %p94 = por %p92, %p93
      %p95 = scmp.ne.s32.totalorder %s87, %s89
      %p96 = scmp.eq.s32.totalorder %s25, 3
      %p97 = por %p95, %p96
      %p98 = scmp.ne.s32.totalorder %s89, %s90
      %p99 = scmp.eq.s32.totalorder %s25, 0
      %p100 = por %p98, %p99
      %p101 = scmp.ne.s32.totalorder %s89, %s90
      %p102 = scmp.eq.s32.totalorder %s26, 3
      %p103 = por %p101, %p102
      %p105 = scmp.ne.s32.totalorder %s90, %s104
      %p106 = scmp.eq.s32.totalorder %s26, 0
      %p107 = por %p105, %p106
      %s109 = sadd.s32 %s108, 1
      %p112 = scmp.eq.s32.totalorder %s20, 3
      %p113 = scmp.ne.s32.totalorder %s108, %s110
      %p114 = scmp.eq.s32.totalorder %s20, 0
      %p115 = por %p113, %p114
      %p116 = scmp.ne.s32.totalorder %s108, %s110
      %p117 = scmp.eq.s32.totalorder %s25, 3
      %p118 = por %p116, %p117
      %p119 = scmp.ne.s32.totalorder %s110, %s111
      %p120 = scmp.eq.s32.totalorder %s25, 0
      %p121 = por %p119, %p120
      %p122 = scmp.ne.s32.totalorder %s110, %s111
      %p123 = scmp.eq.s32.totalorder %s26, 3
      %p124 = por %p122, %p123
      %p126 = scmp.ne.s32.totalorder %s111, %s125
      %p127 = scmp.eq.s32.totalorder %s26, 0
      %p128 = por %p126, %p127
      %s130 = sadd.s32 %s129, 1
      %p133 = scmp.eq.s32.totalorder %s20, 3
      %p134 = scmp.ne.s32.totalorder %s129, %s131
      %p135 = scmp.eq.s32.totalorder %s20, 0
      %p136 = por %p134, %p135
      %p137 = scmp.ne.s32.totalorder %s129, %s131
      %p138 = scmp.eq.s32.totalorder %s25, 3
      %p139 = por %p137, %p138
      %p140 = scmp.ne.s32.totalorder %s131, %s132
      %p141 = scmp.eq.s32.totalorder %s25, 0
      %p142 = por %p140, %p141
      %p143 = scmp.ne.s32.totalorder %s131, %s132
      %p144 = scmp.eq.s32.totalorder %s26, 3
      %p145 = por %p143, %p144
      %p147 = scmp.ne.s32.totalorder %s132, %s146
      %p148 = scmp.eq.s32.totalorder %s26, 0
      %p149 = por %p147, %p148
      %s151 = sadd.s32 %s150, 1
      %p154 = scmp.eq.s32.totalorder %s20, 3
      %p155 = scmp.ne.s32.totalorder %s150, %s152
      %p156 = scmp.eq.s32.totalorder %s20, 0
      %p157 = por %p155, %p156
      %p158 = scmp.ne.s32.totalorder %s150, %s152
      %p159 = scmp.eq.s32.totalorder %s25, 3
      %p160 = por %p158, %p159
      %p161 = scmp.ne.s32.totalorder %s152, %s153
      %p162 = scmp.eq.s32.totalorder %s25, 0
      %p163 = por %p161, %p162
      %p164 = scmp.ne.s32.totalorder %s152, %s153
      %p165 = scmp.eq.s32.totalorder %s26, 3
      %p166 = por %p164, %p165
      %p168 = scmp.ne.s32.totalorder %s153, %s167
      %p169 = scmp.eq.s32.totalorder %s26, 0
      %p170 = por %p168, %p169
      %s172 = sadd.s32 %s171, 1
      %p175 = scmp.eq.s32.totalorder %s20, 3
      %p176 = scmp.ne.s32.totalorder %s171, %s173
      %p177 = scmp.eq.s32.totalorder %s20, 0
      %p178 = por %p176, %p177
      %p179 = scmp.ne.s32.totalorder %s171, %s173
      %p180 = scmp.eq.s32.totalorder %s25, 3
      %p181 = por %p179, %p180
      %p182 = scmp.ne.s32.totalorder %s173, %s174
      %p183 = scmp.eq.s32.totalorder %s25, 0
      %p184 = por %p182, %p183
      %p185 = scmp.ne.s32.totalorder %s173, %s174
      %p186 = scmp.eq.s32.totalorder %s26, 3
      %p187 = por %p185, %p186
      %p189 = scmp.ne.s32.totalorder %s174, %s188
      %p190 = scmp.eq.s32.totalorder %s26, 0
      %p191 = por %p189, %p190
      %s193 = sadd.s32 %s192, 1
      %p196 = scmp.eq.s32.totalorder %s20, 3
      %p197 = scmp.ne.s32.totalorder %s192, %s194
      %p198 = scmp.eq.s32.totalorder %s20, 0
      %p199 = por %p197, %p198
      %p200 = scmp.ne.s32.totalorder %s192, %s194
      %p201 = scmp.eq.s32.totalorder %s25, 3
      %p202 = por %p200, %p201
      %p203 = scmp.ne.s32.totalorder %s194, %s195
      %p204 = scmp.eq.s32.totalorder %s25, 0
      %p205 = por %p203, %p204
      %p206 = scmp.ne.s32.totalorder %s194, %s195
      %p207 = scmp.eq.s32.totalorder %s26, 3
      %p208 = por %p206, %p207
      %p210 = scmp.ne.s32.totalorder %s195, %s209
      %p211 = scmp.eq.s32.totalorder %s26, 0
      %p212 = por %p210, %p211
      %s213 = ssub.s32 %s27, %s39
      %p214 = scmp.eq.s32.totalorder %s213, 0
      %s216 = sadd.s32 %s215, 1
      %s217 = scalar_select %p214, %s215, %s216
      %p220 = pneg %p214
      %p221 = scmp.eq.s32.totalorder %s20, 3
      %p222 = por %p220, %p221
      %p223 = scmp.ne.s32.totalorder %s215, %s218
      %p224 = scmp.eq.s32.totalorder %s20, 0
      %p225 = por %p223, %p224
      %p226 = scmp.ne.s32.totalorder %s215, %s218
      %p227 = scmp.eq.s32.totalorder %s25, 3
      %p228 = por %p226, %p227
      %p229 = scmp.ne.s32.totalorder %s218, %s219
      %p230 = scmp.eq.s32.totalorder %s25, 0
      %p231 = por %p229, %p230
      %p232 = scmp.ne.s32.totalorder %s218, %s219
      %p233 = scmp.eq.s32.totalorder %s26, 3
      %p234 = por %p232, %p233
      %p236 = scmp.ne.s32.totalorder %s219, %s235
      %p237 = scmp.eq.s32.totalorder %s26, 0
      %p238 = por %p236, %p237
      %s239 = ssub.s32 %s27, %s39
      %p240 = scmp.eq.s32.totalorder %s239, 0
      %s242 = sadd.s32 %s241, 1
      %s243 = scalar_select %p240, %s241, %s242
      %p246 = pneg %p240
      %p247 = scmp.eq.s32.totalorder %s20, 3
      %p248 = por %p246, %p247
      %p249 = scmp.ne.s32.totalorder %s241, %s244
      %p250 = scmp.eq.s32.totalorder %s20, 0
      %p251 = por %p249, %p250
      %p252 = scmp.ne.s32.totalorder %s241, %s244
      %p253 = scmp.eq.s32.totalorder %s25, 3
      %p254 = por %p252, %p253
      %p255 = scmp.ne.s32.totalorder %s244, %s245
      %p256 = scmp.eq.s32.totalorder %s25, 0
      %p257 = por %p255, %p256
      %p258 = scmp.ne.s32.totalorder %s244, %s245
      %p259 = scmp.eq.s32.totalorder %s26, 3
      %p260 = por %p258, %p259
      %p262 = scmp.ne.s32.totalorder %s245, %s261
      %p263 = scmp.eq.s32.totalorder %s26, 0
      %p264 = por %p262, %p263
      %p265 = scmp.le.s32.totalorder 1, %s20
      %p266 = scmp.lt.s32.totalorder %s20, 5
      %p267 = pnand %p265, %p266
      %p268 = pneg %p267
      // Predicated region
      $region9: #{tpu_custom_call.1} parent=5 // pred_check
        _
      $region10: #{tpu_custom_call.1} parent=5 // pred_check_branch
        %270 = sbr.rel (%p267) target = $region12
      $region11: #{tpu_custom_call.1} parent=5 // pred_region
        %s271 = ssub.s32 %s20, 1
        // Predicated region
        $region13: #{tpu_custom_call.1} parent=11 // pred_check
          %p272 = pneg %p58
        $region14: #{tpu_custom_call.1} parent=11 // pred_check_branch
          %274 = sbr.rel (%p272) target = $region16
        $region15: #{tpu_custom_call.1} parent=11 // pred_region
          %s276 = ssub.s32 256, 256
          %277 = vsyncadd [#allocation3], %s276
          %s278 = smul.addr %s29, 2
          %s279 = smul.addr %s278, 128
          %s280 = scalar_lea.hbm %s0, %s279
          %s282 = sshll.u32 [#allocation2], 4
          %s283 = int_to_ptr.vmem [resolvable:$true] %s282
          %285 = dma.hbm_to_vmem [thread:$0]  %s280, 256, %s283, [#allocation3]
        $region16: #{tpu_custom_call.1} parent=11 // pred_fallthru
          _
        // Predicated region
        $region17: #{tpu_custom_call.1} parent=11 // pred_check
          %p286 = pneg %p79
        $region18: #{tpu_custom_call.1} parent=11 // pred_check_branch
          %288 = sbr.rel (%p286) target = $region20
        $region19: #{tpu_custom_call.1} parent=11 // pred_region
          %s290 = ssub.s32 128, 128
          %291 = vsyncadd [#allocation6], %s290
          %s292 = sshll.u32 [#allocation5], 4
          %s293 = int_to_ptr.vmem [resolvable:$true] %s292
          %298 = dma.hbm_to_vmem [thread:$0]  %s1, 128, %s293, [#allocation6], 32, 32, 2
        $region20: #{tpu_custom_call.1} parent=11 // pred_fallthru
          _
        // Predicated region
        $region21: #{tpu_custom_call.1} parent=11 // pred_check
          %p299 = pneg %p100
        $region22: #{tpu_custom_call.1} parent=11 // pred_check_branch
          %301 = sbr.rel (%p299) target = $region24
        $region23: #{tpu_custom_call.1} parent=11 // pred_region
          %s303 = ssub.s32 8192, 8192
          %304 = vsyncadd [#allocation6], %s303
          %s305 = sshll.u32 [#allocation7], 4
          %s306 = int_to_ptr.vmem [resolvable:$true] %s305
          %311 = dma.hbm_to_vmem [thread:$0]  %s2, 8192, %s306, [#allocation6], 64, 64, 4
        $region24: #{tpu_custom_call.1} parent=11 // pred_fallthru
          _
        // Predicated region
        $region25: #{tpu_custom_call.1} parent=11 // pred_check
          %p312 = pneg %p121
        $region26: #{tpu_custom_call.1} parent=11 // pred_check_branch
          %314 = sbr.rel (%p312) target = $region28
        $region27: #{tpu_custom_call.1} parent=11 // pred_region
          _
        $region28: #{tpu_custom_call.1} parent=11 // pred_fallthru
          _
        // Predicated region
        $region29: #{tpu_custom_call.1} parent=11 // pred_check
          %p315 = pneg %p142
        $region30: #{tpu_custom_call.1} parent=11 // pred_check_branch
          %317 = sbr.rel (%p315) target = $region32
        $region31: #{tpu_custom_call.1} parent=11 // pred_region
          %s319 = ssub.s32 4096, 4096
          %320 = vsyncadd [#allocation9], %s319
          %s321 = sshll.u32 [#allocation8], 4
          %s322 = int_to_ptr.vmem [resolvable:$true] %s321
          %327 = dma.hbm_to_vmem [thread:$0]  %s4, 4096, %s322, [#allocation9], 64, 64, 4
        $region32: #{tpu_custom_call.1} parent=11 // pred_fallthru
          _
        // Predicated region
        $region33: #{tpu_custom_call.1} parent=11 // pred_check
          %p328 = pneg %p163
        $region34: #{tpu_custom_call.1} parent=11 // pred_check_branch
          %330 = sbr.rel (%p328) target = $region36
        $region35: #{tpu_custom_call.1} parent=11 // pred_region
          _
        $region36: #{tpu_custom_call.1} parent=11 // pred_fallthru
          _
        // Predicated region
        $region37: #{tpu_custom_call.1} parent=11 // pred_check
          %p331 = pneg %p184
        $region38: #{tpu_custom_call.1} parent=11 // pred_check_branch
          %333 = sbr.rel (%p331) target = $region40
        $region39: #{tpu_custom_call.1} parent=11 // pred_region
          %s335 = ssub.s32 16384, 16384
          %336 = vsyncadd [#allocation9], %s335
          %s337 = sshll.u32 [#allocation10], 4
          %s338 = int_to_ptr.vmem [resolvable:$true] %s337
          %343 = dma.hbm_to_vmem [thread:$0]  %s6, 16384, %s338, [#allocation9], 256, 256, 16
        $region40: #{tpu_custom_call.1} parent=11 // pred_fallthru
          _
        // Predicated region
        $region41: #{tpu_custom_call.1} parent=11 // pred_check
          %p344 = pneg %p205
        $region42: #{tpu_custom_call.1} parent=11 // pred_check_branch
          %346 = sbr.rel (%p344) target = $region44
        $region43: #{tpu_custom_call.1} parent=11 // pred_region
          _
        $region44: #{tpu_custom_call.1} parent=11 // pred_fallthru
          _
      $region12: #{tpu_custom_call.1} parent=5 // pred_fallthru
        _
      %p347 = scmp.lt.s32.totalorder %s20, 4
      // Predicated region
      $region45: #{tpu_custom_call.1} parent=5 // pred_check
        %p348 = pneg %p347
      $region46: #{tpu_custom_call.1} parent=5 // pred_check_branch
        %350 = sbr.rel (%p348) target = $region48
      $region47: #{tpu_custom_call.1} parent=5 // pred_region
        _
      $region48: #{tpu_custom_call.1} parent=5 // pred_fallthru
        _
      %p351 = scmp.le.s32.totalorder 1, %s20
      %p352 = scmp.lt.s32.totalorder %s20, 5
      %p353 = pnand %p351, %p352
      %p354 = pneg %p353
      // Predicated region
      $region49: #{tpu_custom_call.1} parent=5 // pred_check
        _
      $region50: #{tpu_custom_call.1} parent=5 // pred_check_branch
        %356 = sbr.rel (%p353) target = $region52
      $region51: #{tpu_custom_call.1} parent=5 // pred_region
        %s357 = ssub.s32 %s20, 1
        // Predicated region
        $region53: #{tpu_custom_call.1} parent=51 // pred_check
          %p358 = pneg %p58
        $region54: #{tpu_custom_call.1} parent=51 // pred_check_branch
          %360 = sbr.rel (%p358) target = $region56
        $region55: #{tpu_custom_call.1} parent=51 // pred_region
          %361 = dma.done [#allocation3], 256
        $region56: #{tpu_custom_call.1} parent=51 // pred_fallthru
          _
        // Predicated region
        $region57: #{tpu_custom_call.1} parent=51 // pred_check
          %p362 = pneg %p79
        $region58: #{tpu_custom_call.1} parent=51 // pred_check_branch
          %364 = sbr.rel (%p362) target = $region60
        $region59: #{tpu_custom_call.1} parent=51 // pred_region
          %365 = dma.done [#allocation6], 128
        $region60: #{tpu_custom_call.1} parent=51 // pred_fallthru
          _
        // Predicated region
        $region61: #{tpu_custom_call.1} parent=51 // pred_check
          %p366 = pneg %p100
        $region62: #{tpu_custom_call.1} parent=51 // pred_check_branch
          %368 = sbr.rel (%p366) target = $region64
        $region63: #{tpu_custom_call.1} parent=51 // pred_region
          %369 = dma.done [#allocation6], 8192
        $region64: #{tpu_custom_call.1} parent=51 // pred_fallthru
          _
        // Predicated region
        $region65: #{tpu_custom_call.1} parent=51 // pred_check
          %p370 = pneg %p142
        $region66: #{tpu_custom_call.1} parent=51 // pred_check_branch
          %372 = sbr.rel (%p370) target = $region68
        $region67: #{tpu_custom_call.1} parent=51 // pred_region
          %373 = dma.done [#allocation9], 4096
        $region68: #{tpu_custom_call.1} parent=51 // pred_fallthru
          _
        // Predicated region
        $region69: #{tpu_custom_call.1} parent=51 // pred_check
          %p374 = pneg %p184
        $region70: #{tpu_custom_call.1} parent=51 // pred_check_branch
          %376 = sbr.rel (%p374) target = $region72
        $region71: #{tpu_custom_call.1} parent=51 // pred_region
          %377 = dma.done [#allocation9], 16384
        $region72: #{tpu_custom_call.1} parent=51 // pred_fallthru
          _
        %p378 = pneg %p58
        %p379 = pneg %p55
        %p380 = pneg %p79
        %p381 = pneg %p76
        %p382 = pneg %p100
        %p383 = pneg %p97
        %p384 = pneg %p121
        %p385 = pneg %p118
        %p386 = pneg %p142
        %p387 = pneg %p139
        %p388 = pneg %p163
        %p389 = pneg %p160
        %p390 = pneg %p184
        %p391 = pneg %p181
        %p392 = pneg %p205
        %p393 = pneg %p202
        %p394 = pneg %p231
        %p395 = pneg %p228
        %p396 = pneg %p257
        %p397 = pneg %p254
        %p398 = scmp.lt.s32.totalorder %s29, 0
        %s399 = scalar_select %p398, %s29, 0
        %s400 = smul.addr %s399, 8
        %s401 = scalar_lea.vmem %s9, %s400
        %p402 = scmp.lt.s32.totalorder %s29, 0
        %s403 = scalar_select %p402, %s29, 0
        %s404 = smul.addr %s403, 8
        %s405 = scalar_lea.vmem %s9, %s404
        %p407 = scmp.eq.s32.totalorder %s30, 0
        // Predicated region
        $region73: #{tpu_custom_call.1} parent=51 // pred_check
          %p408 = pneg %p407
        $region74: #{tpu_custom_call.1} parent=51 // pred_check_branch
          %410 = sbr.rel (%p408) target = $region76
        $region75: #{tpu_custom_call.1} parent=51 // pred_region
          %v411 = vld [vmem:[#allocation2] sm:$0xff]
          %v412 = vld [vmem:[#allocation2 + $0x8] sm:$0xff]
          %413 = vst [vmem:[#allocation11] sm:$0xff] %v411
          %414 = vst [vmem:[#allocation11 + $0x8] sm:$0xff] %v412
          %vm415 = vcmask 7168
          %416 = vst.msk [vmem:[%s405] sm:$0xff] %vm415, 0.0
        $region76: #{tpu_custom_call.1} parent=51 // pred_fallthru
          _
        %v417 = vld [vmem:[#allocation11] sm:$0xff]
        %v418 = vld [vmem:[#allocation11 + $0x8] sm:$0xff]
        %s419 = smul.u32 %s30, 2
        %s420 = scalar_lea.vmem [#allocation5], %s419
        %v421 = vld [vmem:[%s420] sm:$0x3]
        %v422 = vsub.f32 1.0, %v421
        %v424 = vlaneseq
        %v425 = vshrl.u32 %v424, 7
        %v426 = vsub.s32 0, %v425
        %v427 = vrot.slane %v421, %v426
        %v428 = vlaneseq
        %v429 = vshrl.u32 %v428, 7
        %v430 = vsub.s32 1, %v429
        %v431 = vrot.slane %v421, %v430
        %v434 = vmul.f32 %v427, %v417
        %v435 = vmul.f32 %v431, %v418
        %v436 = vpack.c.bf16 %v434, %v434
        %v437 = vpack.c.bf16 %v435, %v435
        %s438 = smul.u32 %s30, 32
        %s439 = smul.addr %s438, 4
        %s440 = scalar_lea.vmem [#allocation7], %s439
        %v441 = vld [vmem:[%s440] sm:$0xf]
        %v442 = vld [vmem:[%s440 + $0x4] sm:$0xf]
        %v443 = vld [vmem:[%s440 + $0x8] sm:$0xf]
        %v444 = vld [vmem:[%s440 + $0xc] sm:$0xf]
        %v445 = vld [vmem:[%s440 + $0x10] sm:$0xf]
        %v446 = vld [vmem:[%s440 + $0x14] sm:$0xf]
        %v447 = vld [vmem:[%s440 + $0x18] sm:$0xf]
        %v448 = vld [vmem:[%s440 + $0x1c] sm:$0xf]
        %v449 = vld [vmem:[%s440 + $0x20] sm:$0xf]
        %v450 = vld [vmem:[%s440 + $0x24] sm:$0xf]
        %v451 = vld [vmem:[%s440 + $0x28] sm:$0xf]
        %v452 = vld [vmem:[%s440 + $0x2c] sm:$0xf]
        %v453 = vld [vmem:[%s440 + $0x30] sm:$0xf]
        %v454 = vld [vmem:[%s440 + $0x34] sm:$0xf]
        %v455 = vld [vmem:[%s440 + $0x38] sm:$0xf]
        %v456 = vld [vmem:[%s440 + $0x3c] sm:$0xf]
        %v457 = vld [vmem:[%s440 + $0x40] sm:$0xf]
        %v458 = vld [vmem:[%s440 + $0x44] sm:$0xf]
        %v459 = vld [vmem:[%s440 + $0x48] sm:$0xf]
        %v460 = vld [vmem:[%s440 + $0x4c] sm:$0xf]
        %v461 = vld [vmem:[%s440 + $0x50] sm:$0xf]
        %v462 = vld [vmem:[%s440 + $0x54] sm:$0xf]
        %v463 = vld [vmem:[%s440 + $0x58] sm:$0xf]
        %v464 = vld [vmem:[%s440 + $0x5c] sm:$0xf]
        %v465 = vld [vmem:[%s440 + $0x60] sm:$0xf]
        %v466 = vld [vmem:[%s440 + $0x64] sm:$0xf]
        %v467 = vld [vmem:[%s440 + $0x68] sm:$0xf]
        %v468 = vld [vmem:[%s440 + $0x6c] sm:$0xf]
        %v469 = vld [vmem:[%s440 + $0x70] sm:$0xf]
        %v470 = vld [vmem:[%s440 + $0x74] sm:$0xf]
        %v471 = vld [vmem:[%s440 + $0x78] sm:$0xf]
        %v472 = vld [vmem:[%s440 + $0x7c] sm:$0xf]
        %s473 = scalar_lea.vmem %s3, %s30
        %v474 = vld [vmem:[%s473] sm:$0x1]
        %v476 = vlaneseq
        %v477 = vshrl.u32 %v476, 7
        %v478 = vsub.s32 0, %v477
        %v479 = vrot.slane %v474, %v478
        %v513 = vunpack.c.l.b16 %v441
        %v514 = vunpack.c.l.b16 %v442
        %v515 = vunpack.c.l.b16 %v443
        %v516 = vunpack.c.l.b16 %v444
        %v517 = vunpack.c.l.b16 %v445
        %v518 = vunpack.c.l.b16 %v446
        %v519 = vunpack.c.l.b16 %v447
        %v520 = vunpack.c.l.b16 %v448
        %v521 = vunpack.c.l.b16 %v449
        %v522 = vunpack.c.l.b16 %v450
        %v523 = vunpack.c.l.b16 %v451
        %v524 = vunpack.c.l.b16 %v452
        %v525 = vunpack.c.l.b16 %v453
        %v526 = vunpack.c.l.b16 %v454
        %v527 = vunpack.c.l.b16 %v455
        %v528 = vunpack.c.l.b16 %v456
        %v529 = vunpack.c.l.b16 %v457
        %v530 = vunpack.c.l.b16 %v458
        %v531 = vunpack.c.l.b16 %v459
        %v532 = vunpack.c.l.b16 %v460
        %v533 = vunpack.c.l.b16 %v461
        %v534 = vunpack.c.l.b16 %v462
        %v535 = vunpack.c.l.b16 %v463
        %v536 = vunpack.c.l.b16 %v464
        %v537 = vunpack.c.l.b16 %v465
        %v538 = vunpack.c.l.b16 %v466
        %v539 = vunpack.c.l.b16 %v467
        %v540 = vunpack.c.l.b16 %v468
        %v541 = vunpack.c.l.b16 %v469
        %v542 = vunpack.c.l.b16 %v470
        %v543 = vunpack.c.l.b16 %v471
        %v544 = vunpack.c.l.b16 %v472
        %v545 = vpack.c.b16 %v514, %v513
        %v546 = vpack.c.b16 %v516, %v515
        %v547 = vpack.c.b16 %v518, %v517
        %v548 = vpack.c.b16 %v520, %v519
        %v549 = vpack.c.b16 %v522, %v521
        %v550 = vpack.c.b16 %v524, %v523
        %v551 = vpack.c.b16 %v526, %v525
        %v552 = vpack.c.b16 %v528, %v527
        %v553 = vpack.c.b16 %v530, %v529
        %v554 = vpack.c.b16 %v532, %v531
        %v555 = vpack.c.b16 %v534, %v533
        %v556 = vpack.c.b16 %v536, %v535
        %v557 = vpack.c.b16 %v538, %v537
        %v558 = vpack.c.b16 %v540, %v539
        %v559 = vpack.c.b16 %v542, %v541
        %v560 = vpack.c.b16 %v544, %v543
        %577 = vmatprep.subr.bf16.mxu0 0
        %578 = vmatpush1.bf16.msra.mxu0 %v545
        %579 = vmatprep.subr.bf16.mxu0 0
        %580 = vmatpush1.bf16.msra.mxu0 %v546
        %581 = vmatprep.subr.bf16.mxu0 0
        %582 = vmatpush1.bf16.msra.mxu0 %v547
        %583 = vmatprep.subr.bf16.mxu0 0
        %584 = vmatpush1.bf16.msra.mxu0 %v548
        %585 = vmatprep.subr.bf16.mxu0 0
        %586 = vmatpush1.bf16.msra.mxu0 %v549
        %587 = vmatprep.subr.bf16.mxu0 0
        %588 = vmatpush1.bf16.msra.mxu0 %v550
        %589 = vmatprep.subr.bf16.mxu0 0
        %590 = vmatpush1.bf16.msra.mxu0 %v551
        %591 = vmatprep.subr.bf16.mxu0 0
        %592 = vmatpush1.bf16.msra.mxu0 %v552
        %593 = vmatprep.subr.bf16.mxu0 0
        %594 = vmatpush1.bf16.msra.mxu0 %v553
        %595 = vmatprep.subr.bf16.mxu0 0
        %596 = vmatpush1.bf16.msra.mxu0 %v554
        %597 = vmatprep.subr.bf16.mxu0 0
        %598 = vmatpush1.bf16.msra.mxu0 %v555
        %599 = vmatprep.subr.bf16.mxu0 0
        %600 = vmatpush1.bf16.msra.mxu0 %v556
        %601 = vmatprep.subr.bf16.mxu0 0
        %602 = vmatpush1.bf16.msra.mxu0 %v557
        %603 = vmatprep.subr.bf16.mxu0 0
        %604 = vmatpush1.bf16.msra.mxu0 %v558
        %605 = vmatprep.subr.bf16.mxu0 0
        %606 = vmatpush1.bf16.msra.mxu0 %v559
        %607 = vmatprep.subr.bf16.mxu0 0
        %608 = vmatpush1.bf16.msra.mxu0 %v560
        %609 = vmatprep.mubr.bf16.mxu0 %v437
        %610 = vmatmul.mubr.bf16.gmra.mrb[0].mxu0 %v436
        %v611 = vpop.f32.mrb[0].mxu0
        %v612 = vadd.f32 %v479, %v611
        %v613 = vpop.f32.mrb[0].mxu0
        %v614 = vpop.f32.mrb[0].mxu0
        %v615 = vpop.f32.mrb[0].mxu0
        %616 = vdwg.mxu0
        %vm617 = vcmp.gt.f32.partialorder %v612, 0.0
        %v618 = vmul.f32 %v612, 0.01
        %v619 = vsel %vm617, %v612, %v618
        %v620 = vpack.c.bf16 %v619, %v619
        %s621 = smul.u32 %s30, 16
        %s622 = smul.addr %s621, 4
        %s623 = scalar_lea.vmem [#allocation8], %s622
        %v624 = vld [vmem:[%s623] sm:$0xf]
        %v625 = vld [vmem:[%s623 + $0x4] sm:$0xf]
        %v626 = vld [vmem:[%s623 + $0x8] sm:$0xf]
        %v627 = vld [vmem:[%s623 + $0xc] sm:$0xf]
        %v628 = vld [vmem:[%s623 + $0x10] sm:$0xf]
        %v629 = vld [vmem:[%s623 + $0x14] sm:$0xf]
        %v630 = vld [vmem:[%s623 + $0x18] sm:$0xf]
        %v631 = vld [vmem:[%s623 + $0x1c] sm:$0xf]
        %v632 = vld [vmem:[%s623 + $0x20] sm:$0xf]
        %v633 = vld [vmem:[%s623 + $0x24] sm:$0xf]
        %v634 = vld [vmem:[%s623 + $0x28] sm:$0xf]
        %v635 = vld [vmem:[%s623 + $0x2c] sm:$0xf]
        %v636 = vld [vmem:[%s623 + $0x30] sm:$0xf]
        %v637 = vld [vmem:[%s623 + $0x34] sm:$0xf]
        %v638 = vld [vmem:[%s623 + $0x38] sm:$0xf]
        %v639 = vld [vmem:[%s623 + $0x3c] sm:$0xf]
        %s640 = scalar_lea.vmem %s5, %s30
        %v641 = vld [vmem:[%s640] sm:$0x1]
        %v643 = vlaneseq
        %v644 = vshrl.u32 %v643, 7
        %v645 = vsub.s32 0, %v644
        %v646 = vrot.slane %v641, %v645
        %v664 = vunpack.c.l.b16 %v624
        %v665 = vunpack.c.l.b16 %v625
        %v666 = vunpack.c.l.b16 %v626
        %v667 = vunpack.c.l.b16 %v627
        %v668 = vunpack.c.l.b16 %v628
        %v669 = vunpack.c.l.b16 %v629
        %v670 = vunpack.c.l.b16 %v630
        %v671 = vunpack.c.l.b16 %v631
        %v672 = vunpack.c.l.b16 %v632
        %v673 = vunpack.c.l.b16 %v633
        %v674 = vunpack.c.l.b16 %v634
        %v675 = vunpack.c.l.b16 %v635
        %v676 = vunpack.c.l.b16 %v636
        %v677 = vunpack.c.l.b16 %v637
        %v678 = vunpack.c.l.b16 %v638
        %v679 = vunpack.c.l.b16 %v639
        %v680 = vpack.c.b16 %v665, %v664
        %v681 = vpack.c.b16 %v667, %v666
        %v682 = vpack.c.b16 %v669, %v668
        %v683 = vpack.c.b16 %v671, %v670
        %v684 = vpack.c.b16 %v673, %v672
        %v685 = vpack.c.b16 %v675, %v674
        %v686 = vpack.c.b16 %v677, %v676
        %v687 = vpack.c.b16 %v679, %v678
        %696 = vmatprep.subr.bf16.mxu0 0
        %697 = vmatpush1.bf16.msra.mxu0 %v680
        %698 = vmatprep.subr.bf16.mxu0 0
        %699 = vmatpush1.bf16.msra.mxu0 %v681
        %700 = vmatprep.subr.bf16.mxu0 0
        %701 = vmatpush1.bf16.msra.mxu0 %v682
        %702 = vmatprep.subr.bf16.mxu0 0
        %703 = vmatpush1.bf16.msra.mxu0 %v683
        %704 = vmatprep.subr.bf16.mxu0 0
        %705 = vmatpush1.bf16.msra.mxu0 %v684
        %706 = vmatprep.subr.bf16.mxu0 0
        %707 = vmatpush1.bf16.msra.mxu0 %v685
        %708 = vmatprep.subr.bf16.mxu0 0
        %709 = vmatpush1.bf16.msra.mxu0 %v686
        %710 = vmatprep.subr.bf16.mxu0 0
        %711 = vmatpush1.bf16.msra.mxu0 %v687
        %712 = vmatprep.subr.bf16.mxu0 0
        %713 = vmatpush1.bf16.msra.mxu0 0
        %714 = vmatprep.subr.bf16.mxu0 0
        %715 = vmatpush1.bf16.msra.mxu0 0
        %716 = vmatprep.subr.bf16.mxu0 0
        %717 = vmatpush1.bf16.msra.mxu0 0
        %718 = vmatprep.subr.bf16.mxu0 0
        %719 = vmatpush1.bf16.msra.mxu0 0
        %720 = vmatprep.subr.bf16.mxu0 0
        %721 = vmatpush1.bf16.msra.mxu0 0
        %722 = vmatprep.subr.bf16.mxu0 0
        %723 = vmatpush1.bf16.msra.mxu0 0
        %724 = vmatprep.subr.bf16.mxu0 0
        %725 = vmatpush1.bf16.msra.mxu0 0
        %726 = vmatprep.subr.bf16.mxu0 0
        %727 = vmatpush1.bf16.msra.mxu0 0
        %728 = vmatprep.mubr.bf16.mxu0 0
        %729 = vmatmul.mubr.bf16.gmra.mrb[0].mxu0 %v620
        %v730 = vpop.f32.mrb[0].mxu0
        %v731 = vadd.f32 %v646, %v730
        %v732 = vpop.f32.mrb[0].mxu0
        %v733 = vpop.f32.mrb[0].mxu0
        %v734 = vpop.f32.mrb[0].mxu0
        %735 = vdwg.mxu0
        %vm736 = vcmp.gt.f32.partialorder %v731, 0.0
        %v737 = vmul.f32 %v731, 0.01
        %v738 = vsel %vm736, %v731, %v737
        %v739 = vpack.c.bf16 %v738, %v738
        %s740 = smul.u32 %s30, 64
        %s741 = smul.addr %s740, 4
        %s742 = scalar_lea.vmem [#allocation10], %s741
        %v743 = vld [vmem:[%s742] sm:$0xff]
        %v744 = vld [vmem:[%s742 + $0x8] sm:$0xff]
        %v745 = vld [vmem:[%s742 + $0x10] sm:$0xff]
        %v746 = vld [vmem:[%s742 + $0x18] sm:$0xff]
        %v747 = vld [vmem:[%s742 + $0x20] sm:$0xff]
        %v748 = vld [vmem:[%s742 + $0x28] sm:$0xff]
        %v749 = vld [vmem:[%s742 + $0x30] sm:$0xff]
        %v750 = vld [vmem:[%s742 + $0x38] sm:$0xff]
        %v751 = vld [vmem:[%s742 + $0x40] sm:$0xff]
        %v752 = vld [vmem:[%s742 + $0x48] sm:$0xff]
        %v753 = vld [vmem:[%s742 + $0x50] sm:$0xff]
        %v754 = vld [vmem:[%s742 + $0x58] sm:$0xff]
        %v755 = vld [vmem:[%s742 + $0x60] sm:$0xff]
        %v756 = vld [vmem:[%s742 + $0x68] sm:$0xff]
        %v757 = vld [vmem:[%s742 + $0x70] sm:$0xff]
        %v758 = vld [vmem:[%s742 + $0x78] sm:$0xff]
        %v759 = vld [vmem:[%s742 + $0x80] sm:$0xff]
        %v760 = vld [vmem:[%s742 + $0x88] sm:$0xff]
        %v761 = vld [vmem:[%s742 + $0x90] sm:$0xff]
        %v762 = vld [vmem:[%s742 + $0x98] sm:$0xff]
        %v763 = vld [vmem:[%s742 + $0xa0] sm:$0xff]
        %v764 = vld [vmem:[%s742 + $0xa8] sm:$0xff]
        %v765 = vld [vmem:[%s742 + $0xb0] sm:$0xff]
        %v766 = vld [vmem:[%s742 + $0xb8] sm:$0xff]
        %v767 = vld [vmem:[%s742 + $0xc0] sm:$0xff]
        %v768 = vld [vmem:[%s742 + $0xc8] sm:$0xff]
        %v769 = vld [vmem:[%s742 + $0xd0] sm:$0xff]
        %v770 = vld [vmem:[%s742 + $0xd8] sm:$0xff]
        %v771 = vld [vmem:[%s742 + $0xe0] sm:$0xff]
        %v772 = vld [vmem:[%s742 + $0xe8] sm:$0xff]
        %v773 = vld [vmem:[%s742 + $0xf0] sm:$0xff]
        %v774 = vld [vmem:[%s742 + $0xf8] sm:$0xff]
        %s775 = smul.u32 %s30, 4
        %s776 = scalar_lea.vmem %s7, %s775
        %v777 = vld [vmem:[%s776] sm:$0xf]
        %v779 = vlaneseq
        %v780 = vshrl.u32 %v779, 7
        %v781 = vsub.s32 0, %v780
        %v782 = vrot.slane %v777, %v781
        %v783 = vlaneseq
        %v784 = vshrl.u32 %v783, 7
        %v785 = vsub.s32 1, %v784
        %v786 = vrot.slane %v777, %v785
        %v787 = vlaneseq
        %v788 = vshrl.u32 %v787, 7
        %v789 = vsub.s32 2, %v788
        %v790 = vrot.slane %v777, %v789
        %v791 = vlaneseq
        %v792 = vshrl.u32 %v791, 7
        %v793 = vsub.s32 3, %v792
        %v794 = vrot.slane %v777, %v793
        %v831 = vunpack.c.l.b16 %v743
        %v832 = vunpack.c.h.b16 %v743
        %v833 = vunpack.c.l.b16 %v744
        %v834 = vunpack.c.h.b16 %v744
        %v835 = vunpack.c.l.b16 %v745
        %v836 = vunpack.c.h.b16 %v745
        %v837 = vunpack.c.l.b16 %v746
        %v838 = vunpack.c.h.b16 %v746
        %v839 = vunpack.c.l.b16 %v747
        %v840 = vunpack.c.h.b16 %v747
        %v841 = vunpack.c.l.b16 %v748
        %v842 = vunpack.c.h.b16 %v748
        %v843 = vunpack.c.l.b16 %v749
        %v844 = vunpack.c.h.b16 %v749
        %v845 = vunpack.c.l.b16 %v750
        %v846 = vunpack.c.h.b16 %v750
        %v847 = vunpack.c.l.b16 %v751
        %v848 = vunpack.c.h.b16 %v751
        %v849 = vunpack.c.l.b16 %v752
        %v850 = vunpack.c.h.b16 %v752
        %v851 = vunpack.c.l.b16 %v753
        %v852 = vunpack.c.h.b16 %v753
        %v853 = vunpack.c.l.b16 %v754
        %v854 = vunpack.c.h.b16 %v754
        %v855 = vunpack.c.l.b16 %v755
        %v856 = vunpack.c.h.b16 %v755
        %v857 = vunpack.c.l.b16 %v756
        %v858 = vunpack.c.h.b16 %v756
        %v859 = vunpack.c.l.b16 %v757
        %v860 = vunpack.c.h.b16 %v757
        %v861 = vunpack.c.l.b16 %v758
        %v862 = vunpack.c.h.b16 %v758
        %v863 = vunpack.c.l.b16 %v759
        %v864 = vunpack.c.h.b16 %v759
        %v865 = vunpack.c.l.b16 %v760
        %v866 = vunpack.c.h.b16 %v760
        %v867 = vunpack.c.l.b16 %v761
        %v868 = vunpack.c.h.b16 %v761
        %v869 = vunpack.c.l.b16 %v762
        %v870 = vunpack.c.h.b16 %v762
        %v871 = vunpack.c.l.b16 %v763
        %v872 = vunpack.c.h.b16 %v763
        %v873 = vunpack.c.l.b16 %v764
        %v874 = vunpack.c.h.b16 %v764
        %v875 = vunpack.c.l.b16 %v765
        %v876 = vunpack.c.h.b16 %v765
        %v877 = vunpack.c.l.b16 %v766
        %v878 = vunpack.c.h.b16 %v766
        %v879 = vunpack.c.l.b16 %v767
        %v880 = vunpack.c.h.b16 %v767
        %v881 = vunpack.c.l.b16 %v768
        %v882 = vunpack.c.h.b16 %v768
        %v883 = vunpack.c.l.b16 %v769
        %v884 = vunpack.c.h.b16 %v769
        %v885 = vunpack.c.l.b16 %v770
        %v886 = vunpack.c.h.b16 %v770
        %v887 = vunpack.c.l.b16 %v771
        %v888 = vunpack.c.h.b16 %v771
        %v889 = vunpack.c.l.b16 %v772
        %v890 = vunpack.c.h.b16 %v772
        %v891 = vunpack.c.l.b16 %v773
        %v892 = vunpack.c.h.b16 %v773
        %v893 = vunpack.c.l.b16 %v774
        %v894 = vunpack.c.h.b16 %v774
        %v895 = vpack.c.b16 %v835, %v831
        %v896 = vpack.c.b16 %v836, %v832
        %v897 = vpack.c.b16 %v837, %v833
        %v898 = vpack.c.b16 %v838, %v834
        %v899 = vpack.c.b16 %v843, %v839
        %v900 = vpack.c.b16 %v844, %v840
        %v901 = vpack.c.b16 %v845, %v841
        %v902 = vpack.c.b16 %v846, %v842
        %v903 = vpack.c.b16 %v851, %v847
        %v904 = vpack.c.b16 %v852, %v848
        %v905 = vpack.c.b16 %v853, %v849
        %v906 = vpack.c.b16 %v854, %v850
        %v907 = vpack.c.b16 %v859, %v855
        %v908 = vpack.c.b16 %v860, %v856
        %v909 = vpack.c.b16 %v861, %v857
        %v910 = vpack.c.b16 %v862, %v858
        %v911 = vpack.c.b16 %v867, %v863
        %v912 = vpack.c.b16 %v868, %v864
        %v913 = vpack.c.b16 %v869, %v865
        %v914 = vpack.c.b16 %v870, %v866
        %v915 = vpack.c.b16 %v875, %v871
        %v916 = vpack.c.b16 %v876, %v872
        %v917 = vpack.c.b16 %v877, %v873
        %v918 = vpack.c.b16 %v878, %v874
        %v919 = vpack.c.b16 %v883, %v879
        %v920 = vpack.c.b16 %v884, %v880
        %v921 = vpack.c.b16 %v885, %v881
        %v922 = vpack.c.b16 %v886, %v882
        %v923 = vpack.c.b16 %v891, %v887
        %v924 = vpack.c.b16 %v892, %v888
        %v925 = vpack.c.b16 %v893, %v889
        %v926 = vpack.c.b16 %v894, %v890
        %959 = vmatprep.subr.bf16.mxu0 %v896
        %960 = vmatpush1.bf16.msra.mxu0 %v895
        %961 = vmatprep.subr.bf16.mxu0 %v900
        %962 = vmatpush1.bf16.msra.mxu0 %v899
        %963 = vmatprep.subr.bf16.mxu0 %v904
        %964 = vmatpush1.bf16.msra.mxu0 %v903
        %965 = vmatprep.subr.bf16.mxu0 %v908
        %966 = vmatpush1.bf16.msra.mxu0 %v907
        %967 = vmatprep.subr.bf16.mxu0 %v912
        %968 = vmatpush1.bf16.msra.mxu0 %v911
        %969 = vmatprep.subr.bf16.mxu0 %v916
        %970 = vmatpush1.bf16.msra.mxu0 %v915
        %971 = vmatprep.subr.bf16.mxu0 %v920
        %972 = vmatpush1.bf16.msra.mxu0 %v919
        %973 = vmatprep.subr.bf16.mxu0 %v924
        %974 = vmatpush1.bf16.msra.mxu0 %v923
        %975 = vmatprep.subr.bf16.mxu0 0
        %976 = vmatpush1.bf16.msra.mxu0 0
        %977 = vmatprep.subr.bf16.mxu0 0
        %978 = vmatpush1.bf16.msra.mxu0 0
        %979 = vmatprep.subr.bf16.mxu0 0
        %980 = vmatpush1.bf16.msra.mxu0 0
        %981 = vmatprep.subr.bf16.mxu0 0
        %982 = vmatpush1.bf16.msra.mxu0 0
        %983 = vmatprep.subr.bf16.mxu0 0
        %984 = vmatpush1.bf16.msra.mxu0 0
        %985 = vmatprep.subr.bf16.mxu0 0
        %986 = vmatpush1.bf16.msra.mxu0 0
        %987 = vmatprep.subr.bf16.mxu0 0
        %988 = vmatpush1.bf16.msra.mxu0 0
        %989 = vmatprep.subr.bf16.mxu0 0
        %990 = vmatpush1.bf16.msra.mxu0 0
        %991 = vmatprep.mubr.bf16.mxu0 0
        %992 = vmatmul.mubr.bf16.gmra.mrb[0].mxu0 %v739
        %v993 = vpop.f32.mrb[0].mxu0
        %v994 = vadd.f32 %v782, %v993
        %v995 = vpop.f32.mrb[0].mxu0
        %v996 = vadd.f32 %v786, %v995
        %v997 = vpop.f32.mrb[0].mxu0
        %v998 = vpop.f32.mrb[0].mxu0
        %999 = vdwg.mxu0
        %1000 = vmatprep.subr.bf16.mxu0 %v898
        %1001 = vmatpush1.bf16.msra.mxu0 %v897
        %1002 = vmatprep.subr.bf16.mxu0 %v902
        %1003 = vmatpush1.bf16.msra.mxu0 %v901
        %1004 = vmatprep.subr.bf16.mxu0 %v906
        %1005 = vmatpush1.bf16.msra.mxu0 %v905
        %1006 = vmatprep.subr.bf16.mxu0 %v910
        %1007 = vmatpush1.bf16.msra.mxu0 %v909
        %1008 = vmatprep.subr.bf16.mxu0 %v914
        %1009 = vmatpush1.bf16.msra.mxu0 %v913
        %1010 = vmatprep.subr.bf16.mxu0 %v918
        %1011 = vmatpush1.bf16.msra.mxu0 %v917
        %1012 = vmatprep.subr.bf16.mxu0 %v922
        %1013 = vmatpush1.bf16.msra.mxu0 %v921
        %1014 = vmatprep.subr.bf16.mxu0 %v926
        %1015 = vmatpush1.bf16.msra.mxu0 %v925
        %1016 = vmatprep.subr.bf16.mxu0 0
        %1017 = vmatpush1.bf16.msra.mxu0 0
        %1018 = vmatprep.subr.bf16.mxu0 0
        %1019 = vmatpush1.bf16.msra.mxu0 0
        %1020 = vmatprep.subr.bf16.mxu0 0
        %1021 = vmatpush1.bf16.msra.mxu0 0
        %1022 = vmatprep.subr.bf16.mxu0 0
        %1023 = vmatpush1.bf16.msra.mxu0 0
        %1024 = vmatprep.subr.bf16.mxu0 0
        %1025 = vmatpush1.bf16.msra.mxu0 0
        %1026 = vmatprep.subr.bf16.mxu0 0
        %1027 = vmatpush1.bf16.msra.mxu0 0
        %1028 = vmatprep.subr.bf16.mxu0 0
        %1029 = vmatpush1.bf16.msra.mxu0 0
        %1030 = vmatprep.subr.bf16.mxu0 0
        %1031 = vmatpush1.bf16.msra.mxu0 0
        %1032 = vmatprep.mubr.bf16.mxu0 0
        %1033 = vmatmul.mubr.bf16.gmra.mrb[0].mxu0 %v739
        %v1034 = vpop.f32.mrb[0].mxu0
        %v1035 = vadd.f32 %v790, %v1034
        %v1036 = vpop.f32.mrb[0].mxu0
        %v1037 = vadd.f32 %v794, %v1036
        %v1038 = vpop.f32.mrb[0].mxu0
        %v1039 = vpop.f32.mrb[0].mxu0
        %1040 = vdwg.mxu0
        %v1041 = vtanh.pop %v994
        %v1042 = vtanh.pop %v996
        %v1044 = vlaneseq
        %v1045 = vshrl.u32 %v1044, 7
        %v1046 = vsub.s32 0, %v1045
        %v1047 = vrot.slane %v422, %v1046
        %v1048 = vlaneseq
        %v1049 = vshrl.u32 %v1048, 7
        %v1050 = vsub.s32 1, %v1049
        %v1051 = vrot.slane %v422, %v1050
        %v1054 = vmul.f32 %v1041, %v1047
        %v1055 = vmul.f32 %v1042, %v1051
        %v1056 = vmul.f32 %v1035, %v1047
        %v1057 = vmul.f32 %v1037, %v1051
        %v1058 = vsub.f32 %v417, %v1056
        %v1059 = vsub.f32 %v418, %v1057
        %v1060 = vmul.f32 %v1047, %v1058
        %v1061 = vmul.f32 %v1051, %v1059
        %v1062 = vsub.f32 0.0, %v1054
        %v1063 = vsub.f32 0.0, %v1055
        %v1064 = vmul.f32 %v1062, 1.442695
        %v1065 = vpow.pop %v1064
        %v1066 = vmul.f32 %v1063, 1.442695
        %v1067 = vpow.pop %v1066
        %v1068 = vmul.f32 %v1060, %v1065
        %v1069 = vmul.f32 %v1061, %v1067
        %v1070 = vadd.f32 %v1068, %v434
        %v1071 = vadd.f32 %v1069, %v435
        %1072 = vst [vmem:[#allocation11] sm:$0xff] %v1070
        %1073 = vst [vmem:[#allocation11 + $0x8] sm:$0xff] %v1071
        %v1074 = vld [vmem:[%s405] sm:$0xff]
        %v1075 = vadd.f32 %v1054, %v1055
        %1076 = vadd.xlane.f32.xlu0 %v1075
        %v1077 = vpop.xlane.xlu0 %1076
        %v1078 = vsub.f32 %v1074, %v1077
        %vm1079 = vcmask 7168
        %1080 = vst.msk [vmem:[%s405] sm:$0xff] %vm1079, %v1078
        %p1081 = scmp.lt.s32.totalorder %s29, 0
        %s1082 = scalar_select %p1081, %s29, 0
        %s1083 = smul.addr %s1082, 8
        %s1084 = scalar_lea.vmem %s9, %s1083
        // Predicated region
        $region77: #{tpu_custom_call.1} parent=51 // pred_check
          %p1085 = pneg %p228
        $region78: #{tpu_custom_call.1} parent=51 // pred_check_branch
          %1087 = sbr.rel (%p1085) target = $region80
        $region79: #{tpu_custom_call.1} parent=51 // pred_region
          %s1089 = ssub.s32 256, 256
          %1090 = vsyncadd [#allocation4], %s1089
          %s1091 = smul.addr %s29, 2
          %s1092 = smul.addr %s1091, 128
          %s1093 = scalar_lea.hbm %s8, %s1092
          %s1095 = sshll.u32 [#allocation11], 4
          %s1096 = int_to_ptr.vmem [resolvable:$true] %s1095
          %1098 = dma.vmem_to_hbm [thread:$0]  %s1096, 256, %s1093, [#allocation4]
        $region80: #{tpu_custom_call.1} parent=51 // pred_fallthru
          _
        // Predicated region
        $region81: #{tpu_custom_call.1} parent=51 // pred_check
          %p1099 = pneg %p254
        $region82: #{tpu_custom_call.1} parent=51 // pred_check_branch
          %1101 = sbr.rel (%p1099) target = $region84
        $region83: #{tpu_custom_call.1} parent=51 // pred_region
          _
        $region84: #{tpu_custom_call.1} parent=51 // pred_fallthru
          _
        // Predicated region
        $region85: #{tpu_custom_call.1} parent=51 // pred_check
          %p1102 = pneg %p228
        $region86: #{tpu_custom_call.1} parent=51 // pred_check_branch
          %1104 = sbr.rel (%p1102) target = $region88
        $region87: #{tpu_custom_call.1} parent=51 // pred_region
          %1105 = dma.done [#allocation4], 256
        $region88: #{tpu_custom_call.1} parent=51 // pred_fallthru
          _
        // Predicated region
        $region89: #{tpu_custom_call.1} parent=51 // pred_check
          %p1106 = pneg %p254
        $region90: #{tpu_custom_call.1} parent=51 // pred_check_branch
          %1108 = sbr.rel (%p1106) target = $region92
        $region91: #{tpu_custom_call.1} parent=51 // pred_region
          %p1109 = scmp.lt.s32.totalorder %s29, 0
          %s1110 = scalar_select %p1109, %s29, 0
          %s1111 = smul.addr %s1110, 8
          %s1112 = scalar_lea.vmem %s9, %s1111
        $region92: #{tpu_custom_call.1} parent=51 // pred_fallthru
          _
      $region52: #{tpu_custom_call.1} parent=5 // pred_fallthru
        _
      %p1113 = scmp.le.s32.totalorder 2, %s20
      // Predicated region
      $region93: #{tpu_custom_call.1} parent=5 // pred_check
        %p1114 = pneg %p1113
      $region94: #{tpu_custom_call.1} parent=5 // pred_check_branch
        %1116 = sbr.rel (%p1114) target = $region96
      $region95: #{tpu_custom_call.1} parent=5 // pred_region
        %s1117 = ssub.s32 %s20, 2
      $region96: #{tpu_custom_call.1} parent=5 // pred_fallthru
        _
    $region6: #{tpu_custom_call.1} parent=1 // loop_footer
      %s24 = sadd.s32 1, %s20
    $region7: #{tpu_custom_call.1} parent=1 // loop_footer_branch
      %19 = sbr.rel target = $region3
    $region8: #{tpu_custom_call.1} parent=1 // loop_exit
      _
    %1118 = vsyncpa [#allocation3], 1
    %s1119 = scalar_lea.sflag [#allocation3], 1
    %1120 = vsyncpa %s1119, 1
    %1121 = vsyncpa [#allocation6], 1
    %1122 = vsyncpa [#allocation9], 1
    %1123 = vsyncpa [#allocation4], 1
    %s1124 = scalar_lea.sflag [#allocation4], 1
    %1125 = vsyncpa %s1124, 1

</llo_original>
